<compile_context>
chip_gen: v7x
topology: tpu7x:2x2x1
jax: 0.10.0
libtpu: 0.0.40
codegen_flags: <defaults>
</compile_context>

<pallas_src>
import math
from functools import partial

import jax
import jax.numpy as jnp
from jax import lax
from jax.experimental import pallas as pl
from jax.experimental.pallas import tpu as pltpu

_MASK_NEG = -1e9
_VMEM_LIMIT = 48 * 1024 * 1024   # explicit scoped-VMEM limit (v5e default is 16 MiB)


def _round_up(x, m):
    return (x + m - 1) // m * m


# --------------------------------------------------------------------------
# Tiled bf16 matmul with f32 accumulator (P1 + P3)
# --------------------------------------------------------------------------
def _matmul_kernel(x_ref, w_ref, o_ref, acc_ref):
    @pl.when(pl.program_id(2) == 0)
    def _init():
        acc_ref[...] = jnp.zeros_like(acc_ref)

    acc_ref[...] += jnp.dot(x_ref[...], w_ref[...],
                            preferred_element_type=jnp.float32)

    @pl.when(pl.program_id(2) == pl.num_programs(2) - 1)
    def _store():
        o_ref[...] = acc_ref[...].astype(o_ref.dtype)


def pallas_matmul(x, w, *, tm=512, tn=512, tk=512, out_dtype=jnp.float32):
    """x: [M, K], w: [K, N] -> [M, N] (out_dtype). Inputs cast to bf16 for the
    MXU; accumulation in a float32 VMEM scratch tile over the K grid axis.

    For skinny M (decode) the N/K tiles are enlarged so the GEMM is
    weight-streaming bound instead of grid-step-overhead bound."""
    M, K = x.shape
    K2, N = w.shape
    assert K == K2

    if M <= 64:                       # decode: few rows -> fewer, fatter steps
        tn = max(tn, 1024)
        tk = max(tk, 1024)

    tm = min(tm, _round_up(M, 8))
    tn = min(tn, _round_up(N, 128))
    tk = min(tk, _round_up(K, 128))
    Mp, Np, Kp = _round_up(M, tm), _round_up(N, tn), _round_up(K, tk)

    xb = jnp.pad(x.astype(jnp.bfloat16), ((0, Mp - M), (0, Kp - K)))
    wb = jnp.pad(w.astype(jnp.bfloat16), ((0, Kp - K), (0, Np - N)))

    out = pl.pallas_call(
        _matmul_kernel,
        out_shape=jax.ShapeDtypeStruct((Mp, Np), out_dtype),
        grid=(Mp // tm, Np // tn, Kp // tk),
        in_specs=[
            pl.BlockSpec((tm, tk), lambda i, j, k: (i, k)),
            pl.BlockSpec((tk, tn), lambda i, j, k: (k, j)),
        ],
        out_specs=pl.BlockSpec((tm, tn), lambda i, j, k: (i, j)),
        scratch_shapes=[pltpu.VMEM((tm, tn), jnp.float32)],
        compiler_params=pltpu.CompilerParams(
            dimension_semantics=("parallel", "parallel", "arbitrary"),
            vmem_limit_bytes=_VMEM_LIMIT),
    )(xb, wb)
    return out[:M, :N]


# --------------------------------------------------------------------------
# Flash-style GQA attention kernel (P1 + P3 online softmax, group-batched)
# --------------------------------------------------------------------------
def _flash_attn_kernel(q_ref, k_ref, v_ref, mask_ref, o_ref,
                       m_sc, l_sc, acc_sc, *, group):
    t = pl.program_id(3)

    @pl.when(t == 0)
    def _init():
        m_sc[...] = jnp.full_like(m_sc, -jnp.inf)
        l_sc[...] = jnp.zeros_like(l_sc)
        acc_sc[...] = jnp.zeros_like(acc_sc)

    gq, d = acc_sc.shape            # gq = tq * group (q-major rows)
    tq = gq // group

    # [tq, group, D] -> [tq*group, D]: pure leading-dim merge, q-major rows.
    q = q_ref[0, 0].reshape(gq, d)          # bf16, scale folded into wqkv
    k = k_ref[0, 0]                         # [tkv, D] bf16
    v = v_ref[0, 0]                         # [tkv, D] bf16

    # QK^T without materializing K^T: contract the last dims on the MXU.
    s = lax.dot_general(q, k, (((1,), (1,)), ((), ())),
                        preferred_element_type=jnp.float32)   # [gq, tkv] f32

    # Additive mask (bf16 stream), broadcast over the `group` axis — no copies.
    m = mask_ref[0]                                            # [tq, tkv] bf16
    tkv = m.shape[-1]
    s = (s.reshape(tq, group, tkv) + m[:, None, :]).reshape(gq, tkv)

    # Online softmax (f32 stats in VMEM scratch).
    m_new = jnp.maximum(m_sc[...], s.max(axis=-1, keepdims=True))   # [gq, 1]
    alpha = jnp.exp(m_sc[...] - m_new)
    p = jnp.exp(s - m_new)
    l_sc[...] = alpha * l_sc[...] + p.sum(axis=-1, keepdims=True)
    acc_sc[...] = alpha * acc_sc[...] + jnp.dot(
        p.astype(v.dtype), v, preferred_element_type=jnp.float32)
    m_sc[...] = m_new

    @pl.when(t == pl.num_programs(3) - 1)
    def _finalize():
        inv = pl.reciprocal(l_sc[...], approx=True)           # EUP slot
        out = acc_sc[...] * inv                               # [gq, D] f32
        # q-major rows -> lane-dense [tq, group*D] store (pure reshape).
        o_ref[0] = out.reshape(tq, group * d).astype(o_ref.dtype)


def pallas_flash_attention(q, k, v, mask, *, tq=128, tk_kv=512):
    """q: [B, NKV, S, group, D] bf16 (1/sqrt(D) already folded into wqkv)
       k, v: [B, NKV, T, D] bf16
       mask: [B, S, T] additive (cast to bf16 for streaming; 0 / -1e9 style
             masks are exact, soft biases see ~1% bf16 quantization)
       returns [B, S, NKV*group*D] bf16, heads laid out (kv_head, group) major
       along the last (lane-dense) dim."""
    B, NKV, S, group, D = q.shape
    T = k.shape[2]
    assert (group * D) % 128 == 0 or NKV == 1, (
        "lane-dense output needs group*head_dim to be a multiple of 128 "
        "(true for Falcon-40B: 16*64)")

    tq = min(tq, _round_up(S, 8))
    tkv = min(tk_kv, _round_up(T, 128))     # multiple of 128 -> lane-aligned
    Sp = _round_up(S, tq)
    Tp = _round_up(T, tkv)

    # TODO(synk): for long decode caches, handle the ragged KV tail in-kernel
    # (scalar-prefetched length + iota mask) instead of padding k/v/mask.
    q_p = jnp.pad(q, ((0, 0), (0, 0), (0, Sp - S), (0, 0), (0, 0)))
    k_p = jnp.pad(k, ((0, 0), (0, 0), (0, Tp - T), (0, 0)))
    v_p = jnp.pad(v, ((0, 0), (0, 0), (0, Tp - T), (0, 0)))
    mask_p = jnp.pad(mask.astype(jnp.bfloat16),
                     ((0, 0), (0, Sp - S), (0, Tp - T)),
                     constant_values=_MASK_NEG)

    out = pl.pallas_call(
        partial(_flash_attn_kernel, group=group),
        out_shape=jax.ShapeDtypeStruct((B, Sp, NKV * group * D), jnp.bfloat16),
        grid=(B, NKV, Sp // tq, Tp // tkv),
        in_specs=[
            # all `group` query heads of this KV head, one q tile (q-major)
            pl.BlockSpec((1, 1, tq, group, D),
                         lambda b, j, sq, t: (b, j, sq, 0, 0)),
            pl.BlockSpec((1, 1, tkv, D), lambda b, j, sq, t: (b, j, t, 0)),
            pl.BlockSpec((1, 1, tkv, D), lambda b, j, sq, t: (b, j, t, 0)),
            pl.BlockSpec((1, tq, tkv), lambda b, j, sq, t: (b, sq, t)),
        ],
        # lane-dense output: columns [j*group*D, (j+1)*group*D)
        out_specs=pl.BlockSpec((1, tq, group * D),
                               lambda b, j, sq, t: (b, sq, j)),
        scratch_shapes=[
            pltpu.VMEM((group * tq, 1), jnp.float32),   # running max
            pltpu.VMEM((group * tq, 1), jnp.float32),   # running sum
            pltpu.VMEM((group * tq, D), jnp.float32),   # output accumulator
        ],
        compiler_params=pltpu.CompilerParams(
            dimension_semantics=("parallel", "parallel", "parallel",
                                 "arbitrary"),
            vmem_limit_bytes=_VMEM_LIMIT),
    )(q_p, k_p, v_p, mask_p)
    return out[:, :S, :]


# --------------------------------------------------------------------------
# Glue: rotary embeddings, head split (Falcon new-decoder-architecture)
# --------------------------------------------------------------------------
def _rotary_cos_sin(positions, head_dim, base=10000.0):
    inv_freq = 1.0 / (base ** (jnp.arange(0, head_dim, 2, dtype=jnp.float32)
                               / head_dim))
    angles = positions[:, None].astype(jnp.float32) * inv_freq[None, :]
    cos = jnp.concatenate([jnp.cos(angles), jnp.cos(angles)], axis=-1)
    sin = jnp.concatenate([jnp.sin(angles), jnp.sin(angles)], axis=-1)
    return cos, sin


def _rotate_half(x):
    d = x.shape[-1] // 2
    return jnp.concatenate([-x[..., d:], x[..., :d]], axis=-1)


def falcon_attention_forward(params, x, alibi, attention_mask, layer_past,
                             use_cache, *, attn_q_tile=128, attn_kv_tile=512):
    """Mirrors FalconAttention.forward (Falcon-40B: GQA + rotary, no bias).
    NOTE: the 1/sqrt(head_dim) softmax scale is folded into the q columns of
    params['wqkv'] at parameter-load time (see make_params)."""
    # TODO(synk): alibi bias path — Falcon-40B config uses rotary (alibi=None),
    # so alibi is ignored here.
    del alibi

    NH = params["num_heads"]
    NKV = params["num_kv_heads"]
    D = params["head_dim"]
    group = NH // NKV

    B, S, H = x.shape
    assert H == NH * D

    # --- fused QKV projection (tiled bf16 Pallas GEMM) ---
    fused = pallas_matmul(x.reshape(B * S, H), params["wqkv"])
    fused = fused.reshape(B, S, NKV, group + 2, D)
    q = fused[:, :, :, :group, :]          # [B, S, NKV, group, D] (pre-scaled)
    k = fused[:, :, :, group, :]           # [B, S, NKV, D]
    v = fused[:, :, :, group + 1, :]       # [B, S, NKV, D]

    past_len = 0 if layer_past is None else layer_past[0].shape[2]

    # --- rotary embeddings (NeoX-style, as in HF Falcon) ---
    # TODO(synk): rotary could be fused into the flash kernel (pltpu.roll on
    # otherwise-idle XLU slots) to avoid these full-tensor XLA passes.
    pos = past_len + jnp.arange(S)
    cos, sin = _rotary_cos_sin(pos, D)
    q = q * cos[None, :, None, None, :] + _rotate_half(q) * sin[None, :, None, None, :]
    k = k * cos[None, :, None, :] + _rotate_half(k) * sin[None, :, None, :]

    # --- attention layouts + KV-cache concat ---
    q = q.transpose(0, 2, 1, 3, 4)                     # [B, NKV, S, group, D]
    k = k.transpose(0, 2, 1, 3)                        # [B, NKV, S, D]
    v = v.transpose(0, 2, 1, 3)
    if layer_past is not None:
        # TODO(synk): for decode, write new k/v into a preallocated cache via
        # input_output_aliases instead of a full-cache concat copy.
        k = jnp.concatenate([layer_past[0], k], axis=2)    # [B, NKV, T, D]
        v = jnp.concatenate([layer_past[1], v], axis=2)
    present = (k, v) if use_cache else None

    # --- flash-style GQA attention (Pallas kernel, bf16 MXU / f32 softmax) ---
    q_b = q.astype(jnp.bfloat16)             # scale already folded into wqkv
    k_b = k.astype(jnp.bfloat16)
    v_b = v.astype(jnp.bfloat16)
    attn = pallas_flash_attention(q_b, k_b, v_b, attention_mask,
                                  tq=attn_q_tile, tk_kv=attn_kv_tile)
    # attn is lane-dense bf16 [B, S, NH*D] -> feed the output GEMM directly.

    out = pallas_matmul(attn.reshape(B * S, NH * D), params["wo"])
    out = out.reshape(B, S, H)

    if use_cache:
        return out, present
    return (out,)


# --------------------------------------------------------------------------
# Pure-JAX reference (same math, f32 everywhere) for a sanity check
# --------------------------------------------------------------------------
def _reference_forward(params, x, attention_mask, layer_past):
    NH = params["num_heads"]
    NKV = params["num_kv_heads"]
    D = params["head_dim"]
    group = NH // NKV
    B, S, H = x.shape

    fused = x.reshape(B * S, H) @ params["wqkv"].astype(jnp.float32)
    fused = fused.reshape(B, S, NKV, group + 2, D)
    q = fused[:, :, :, :group, :]     # already carries the 1/sqrt(D) scale
    k = fused[:, :, :, group, :]
    v = fused[:, :, :, group + 1, :]

    past_len = layer_past[0].shape[2]
    pos = past_len + jnp.arange(S)
    cos, sin = _rotary_cos_sin(pos, D)
    q = q * cos[None, :, None, None, :] + _rotate_half(q) * sin[None, :, None, None, :]
    k = k * cos[None, :, None, :] + _rotate_half(k) * sin[None, :, None, :]

    q = q.transpose(0, 2, 3, 1, 4)                                    # [B,NKV,g,S,D]
    k = jnp.concatenate([layer_past[0], k.transpose(0, 2, 1, 3)], axis=2)
    v = jnp.concatenate([layer_past[1], v.transpose(0, 2, 1, 3)], axis=2)

    # No extra /sqrt(D) here: the scale is folded into wqkv's q columns.
    scores = jnp.einsum("bjgsd,bjtd->bjgst", q, k)
    scores = scores + attention_mask[:, None, None, :, :]
    p = jax.nn.softmax(scores, axis=-1)
    o = jnp.einsum("bjgst,bjtd->bjgsd", p, v)
    o = o.transpose(0, 3, 1, 2, 4).reshape(B, S, NH * D)
    out = o.reshape(B * S, NH * D) @ params["wo"].astype(jnp.float32)
    return out.reshape(B, S, H)


# --------------------------------------------------------------------------
# Deterministic parameter init + example run
# --------------------------------------------------------------------------
def make_params(key, hidden, num_heads, num_kv_heads, head_dim):
    group = num_heads // num_kv_heads
    qkv_out = num_kv_heads * (group + 2) * head_dim
    k1, k2 = jax.random.split(key)

    wqkv = 0.02 * jax.random.normal(k1, (hidden, qkv_out), jnp.float32)
    # Fold the softmax 1/sqrt(head_dim) scale into the q columns at load time
    # (columns are laid out [..., kv_head, slot, head_dim] with slot<group = q).
    slot = (jnp.arange(qkv_out) // head_dim) % (group + 2)
    col_scale = jnp.where(slot < group, 1.0 / math.sqrt(head_dim), 1.0)
    wqkv = wqkv * col_scale[None, :]

    return {
        "num_heads": num_heads,
        "num_kv_heads": num_kv_heads,
        "head_dim": head_dim,
        # weights stored bf16 (MXU-native); GEMMs accumulate in f32
        "wqkv": wqkv.astype(jnp.bfloat16),
        "wo": (0.02 * jax.random.normal(k2, (num_heads * head_dim, hidden),
                                        jnp.float32)).astype(jnp.bfloat16),
    }


if __name__ == "__main__":
    import numpy as np

    key = jax.random.PRNGKey(0)
    B, S = 2, 16
    NH, NKV, D = 4, 2, 64          # group = 2, group*D = 128 (lane-dense)
    H = NH * D                     # hidden = 256
    PAST = 152
    T = PAST + S                   # 168 -> padded to 2 KV tiles of 128

    k_params, k_x, k_pk, k_pv = jax.random.split(key, 4)
    params = make_params(k_params, H, NH, NKV, D)

    x = jax.random.normal(k_x, (B, S, H), jnp.float32)
    layer_past = (
        0.1 * jax.random.normal(k_pk, (B, NKV, PAST, D), jnp.float32),
        0.1 * jax.random.normal(k_pv, (B, NKV, PAST, D), jnp.float32),
    )

    # causal additive mask: query i may attend to kv positions <= PAST + i
    q_pos = PAST + jnp.arange(S)[:, None]
    kv_pos = jnp.arange(T)[None, :]
    attention_mask = jnp.where(kv_pos <= q_pos, 0.0, _MASK_NEG).astype(jnp.float32)
    attention_mask = jnp.broadcast_to(attention_mask[None], (B, S, T))

    # Small q/kv tiles so the toy run exercises the multi-tile online softmax
    # and q-tiling paths (production defaults are 128 / 512).
    out, present = falcon_attention_forward(
        params, x, alibi=None, attention_mask=attention_mask,
        layer_past=layer_past, use_cache=True,
        attn_q_tile=8, attn_kv_tile=128)

    jax.block_until_ready(out)
    jax.block_until_ready(present)

    assert out.shape == (B, S, H)
    assert present[0].shape == (B, NKV, T, D)
    assert present[1].shape == (B, NKV, T, D)

    ref = _reference_forward(params, x, attention_mask, layer_past)
    np.testing.assert_allclose(np.asarray(out), np.asarray(ref),
                               rtol=5e-2, atol=2e-2)
    print("KERNEL_OK")
</pallas_src>

<mosaic_0001>
module attributes {stable_mosaic.version = 11 : i64} {
  func.func @_matmul_kernel(%arg0: i32, %arg1: i32, %arg2: i32, %arg3: memref<32x256xbf16, #tpu.memory_space<vmem>>, %arg4: memref<256x512xbf16, #tpu.memory_space<vmem>>, %arg5: memref<32x512xf32, #tpu.memory_space<vmem>>, %arg6: memref<32x512xf32, #tpu.memory_space<vmem>>) attributes {dimension_semantics = [#tpu.dimension_semantics<parallel>, #tpu.dimension_semantics<parallel>, #tpu.dimension_semantics<arbitrary>], iteration_bounds = array<i64: 1, 1, 1>, scalar_prefetch = 0 : i64, scratch_operands = 1 : i64, tpu.core_type = #tpu.core_type<tc>, window_params = [{transform_indices = @transform_0, window_bounds = array<i64: 32, 256>}, {transform_indices = @transform_1, window_bounds = array<i64: 256, 512>}, {transform_indices = @transform_2, window_bounds = array<i64: 32, 512>}]} {
    %c0_i32 = arith.constant 0 : i32
    %0 = arith.cmpi eq, %arg2, %c0_i32 : i32
    %1 = arith.extui %0 : i1 to i32
    %c0_i32_0 = arith.constant 0 : i32
    %2 = arith.cmpi ne, %1, %c0_i32_0 : i32
    scf.if %2 {
      %cst_10 = arith.constant 0.000000e+00 : f32
      %12 = vector.broadcast %cst_10 : f32 to vector<32x512xf32>
      %c0_11 = arith.constant 0 : index
      %c0_12 = arith.constant 0 : index
      %13 = vector.load %arg6[%c0_11, %c0_12] : memref<32x512xf32, #tpu.memory_space<vmem>>, vector<32x512xf32>
      tpu.vector_store %arg6[%c0_11, %c0_12], %12 {strides = array<i32>} : memref<32x512xf32, #tpu.memory_space<vmem>>, vector<32x512xf32>,
    } else {
    }
    %c0 = arith.constant 0 : index
    %c0_1 = arith.constant 0 : index
    %3 = vector.load %arg6[%c0, %c0_1] : memref<32x512xf32, #tpu.memory_space<vmem>>, vector<32x512xf32>
    %c0_2 = arith.constant 0 : index
    %c0_3 = arith.constant 0 : index
    %4 = vector.load %arg3[%c0_2, %c0_3] : memref<32x256xbf16, #tpu.memory_space<vmem>>, vector<32x256xbf16>
    %c0_4 = arith.constant 0 : index
    %c0_5 = arith.constant 0 : index
    %5 = vector.load %arg4[%c0_4, %c0_5] : memref<256x512xbf16, #tpu.memory_space<vmem>>, vector<256x512xbf16>
    %cst = arith.constant dense<0.000000e+00> : vector<32x512xf32>
    %6 = tpu.matmul %4, %5, %cst {dimension_numbers = #tpu.dot_dimension_numbers<[1], [0], [0], [1], [0, 0, 1, 1], [], []>} : vector<32x256xbf16>, vector<256x512xbf16>, vector<32x512xf32> -> vector<32x512xf32>
    %7 = arith.addf %3, %6 : vector<32x512xf32>
    %c0_6 = arith.constant 0 : index
    %c0_7 = arith.constant 0 : index
    %8 = vector.load %arg6[%c0_6, %c0_7] : memref<32x512xf32, #tpu.memory_space<vmem>>, vector<32x512xf32>
    tpu.vector_store %arg6[%c0_6, %c0_7], %7 {strides = array<i32>} : memref<32x512xf32, #tpu.memory_space<vmem>>, vector<32x512xf32>,
    %c0_i32_8 = arith.constant 0 : i32
    %9 = arith.cmpi eq, %arg2, %c0_i32_8 : i32
    %10 = arith.extui %9 : i1 to i32
    %c0_i32_9 = arith.constant 0 : i32
    %11 = arith.cmpi ne, %10, %c0_i32_9 : i32
    scf.if %11 {
      %c0_10 = arith.constant 0 : index
      %c0_11 = arith.constant 0 : index
      %12 = vector.load %arg6[%c0_10, %c0_11] : memref<32x512xf32, #tpu.memory_space<vmem>>, vector<32x512xf32>
      %c0_12 = arith.constant 0 : index
      %c0_13 = arith.constant 0 : index
      %13 = vector.load %arg5[%c0_12, %c0_13] : memref<32x512xf32, #tpu.memory_space<vmem>>, vector<32x512xf32>
      tpu.vector_store %arg5[%c0_12, %c0_13], %12 {strides = array<i32>} : memref<32x512xf32, #tpu.memory_space<vmem>>, vector<32x512xf32>,
    } else {
    }
    return
  }
  func.func @transform_0(%arg0: i32, %arg1: i32, %arg2: i32) -> (i32, i32) {
    %c0_i32 = arith.constant 0 : i32
    return %arg0, %arg2 : i32, i32
  }
  func.func @transform_1(%arg0: i32, %arg1: i32, %arg2: i32) -> (i32, i32) {
    %c0_i32 = arith.constant 0 : i32
    return %arg2, %arg1 : i32, i32
  }
  func.func @transform_2(%arg0: i32, %arg1: i32, %arg2: i32) -> (i32, i32) {
    %c0_i32 = arith.constant 0 : i32
    return %arg0, %arg1 : i32, i32
  }
}

</mosaic_0001>

<llo_original>
// kernel: tpu_custom_call.1
$region0: #{tpu_custom_call.1}
  #allocation0 [shape = 'u32[]', space=smem, size = 0x4, offset = 0x4, fixed_abs, tag = 'smem constant byte address 0x4 - core index']
  #allocation1 [shape = 'u32[144,128]{1,0:T(1,128)}', space=vmem, size = 0x12000, scoped, tag = 'internal scratch']
  #allocation2 [shape = 'f32[32,512]{1,0:T(8,128)}', space=vmem, size = 0x10000, scoped, tag = 'scratch operand']
  %s0 = inlined_call_operand.hbm [shape: bf16[32,256], index: 0, kind: input, shape index: {}]
  %s1 = inlined_call_operand.hbm [shape: bf16[256,512], index: 1, kind: input, shape index: {}]
  %s2 = inlined_call_operand.hbm [shape: f32[32,512], index: 2, kind: output, shape index: {}]
  %s3 = sld [smem:[#allocation0]]
  $region34: #{tpu_custom_call.1} parent=0
    _
  %s5 = ssub.s32 1, %s3
  %s6 = scalar_select 0, %s5, %s3
  $region1: #{tpu_custom_call.1} parent=0
    #allocation3 [shape = 'u8[16384]{0}', space=vmem, size = 0x4000, scoped, tag = 'input window, operand 0, single buffered']
    #allocation4 [shape = 's32[1]{0}', space=sflag, size = 0x4, scoped, tag = 'scoped memory for tpu_custom_call.1']
    #allocation5 [shape = 's32[1]{0}', space=sflag, size = 0x4, scoped, tag = 'scoped memory for tpu_custom_call.1']
    #allocation6 [shape = 'u8[262144]{0}', space=vmem, size = 0x40000, scoped, tag = 'input window, operand 1, single buffered']
    #allocation7 [shape = 's32[1]{0}', space=sflag, size = 0x4, scoped, tag = 'scoped memory for tpu_custom_call.1']
    #allocation8 [shape = 'u8[65536]{0}', space=vmem, size = 0x10000, scoped, tag = 'output window, operand 0, single buffered']
    %7 = vsyncpa [#allocation4], 0
    %8 = vsyncpa [#allocation7], 0
    %9 = vsyncpa [#allocation5], 0
    // Predicated region
    $region2: #{tpu_custom_call.1} parent=1 // pred_check
      _
    $region3: #{tpu_custom_call.1} parent=1 // pred_check_branch
      %11 = sbr.rel (0) target = $region5
    $region4: #{tpu_custom_call.1} parent=1 // pred_region
      %s13 = ssub.s32 512, 512
      %14 = vsyncadd [#allocation4], %s13
      %s15 = sshll.u32 [#allocation3], 4
      %s16 = int_to_ptr.vmem [resolvable:$true] %s15
      %21 = dma.hbm_to_vmem [thread:$0]  %s0, 512, %s16, [#allocation4], 128, 128, 8
    $region5: #{tpu_custom_call.1} parent=1 // pred_fallthru
      _
    // Predicated region
    $region6: #{tpu_custom_call.1} parent=1 // pred_check
      _
    $region7: #{tpu_custom_call.1} parent=1 // pred_check_branch
      %23 = sbr.rel (0) target = $region9
    $region8: #{tpu_custom_call.1} parent=1 // pred_region
      %s25 = ssub.s32 8192, 8192
      %26 = vsyncadd [#allocation7], %s25
      %s27 = sshll.u32 [#allocation6], 4
      %s28 = int_to_ptr.vmem [resolvable:$true] %s27
      %33 = dma.hbm_to_vmem [thread:$0]  %s1, 8192, %s28, [#allocation7], 256, 256, 16
    $region9: #{tpu_custom_call.1} parent=1 // pred_fallthru
      _
    // Predicated region
    $region10: #{tpu_custom_call.1} parent=1 // pred_check
      _
    $region11: #{tpu_custom_call.1} parent=1 // pred_check_branch
      %35 = sbr.rel (0) target = $region13
    $region12: #{tpu_custom_call.1} parent=1 // pred_region
      %36 = dma.done [#allocation4], 512
    $region13: #{tpu_custom_call.1} parent=1 // pred_fallthru
      _
    // Predicated region
    $region14: #{tpu_custom_call.1} parent=1 // pred_check
      _
    $region15: #{tpu_custom_call.1} parent=1 // pred_check_branch
      %38 = sbr.rel (0) target = $region17
    $region16: #{tpu_custom_call.1} parent=1 // pred_region
      %39 = dma.done [#allocation7], 8192
    $region17: #{tpu_custom_call.1} parent=1 // pred_fallthru
      _
    %p40 = scmp.eq.s32.totalorder 0, 0
    // Predicated region
    $region18: #{tpu_custom_call.1} parent=1 // pred_check
      %p41 = pneg %p40
    $region19: #{tpu_custom_call.1} parent=1 // pred_check_branch
      %43 = sbr.rel (%p41) target = $region21
    $region20: #{tpu_custom_call.1} parent=1 // pred_region
      %44 = vst [vmem:[#allocation2] sm:$0xff] 0.0
      %45 = vst [vmem:[#allocation2 + $0x8] sm:$0xff] 0.0
      %46 = vst [vmem:[#allocation2 + $0x10] sm:$0xff] 0.0
      %47 = vst [vmem:[#allocation2 + $0x18] sm:$0xff] 0.0
      %48 = vst [vmem:[#allocation2 + $0x20] sm:$0xff] 0.0
      %49 = vst [vmem:[#allocation2 + $0x28] sm:$0xff] 0.0
      %50 = vst [vmem:[#allocation2 + $0x30] sm:$0xff] 0.0
      %51 = vst [vmem:[#allocation2 + $0x38] sm:$0xff] 0.0
      %52 = vst [vmem:[#allocation2 + $0x40] sm:$0xff] 0.0
      %53 = vst [vmem:[#allocation2 + $0x48] sm:$0xff] 0.0
      %54 = vst [vmem:[#allocation2 + $0x50] sm:$0xff] 0.0
      %55 = vst [vmem:[#allocation2 + $0x58] sm:$0xff] 0.0
      %56 = vst [vmem:[#allocation2 + $0x60] sm:$0xff] 0.0
      %57 = vst [vmem:[#allocation2 + $0x68] sm:$0xff] 0.0
      %58 = vst [vmem:[#allocation2 + $0x70] sm:$0xff] 0.0
      %59 = vst [vmem:[#allocation2 + $0x78] sm:$0xff] 0.0
    $region21: #{tpu_custom_call.1} parent=1 // pred_fallthru
      _
    %v60 = vld [vmem:[#allocation2] sm:$0xff]
    %v61 = vld [vmem:[#allocation2 + $0x8] sm:$0xff]
    %v62 = vld [vmem:[#allocation2 + $0x10] sm:$0xff]
    %v63 = vld [vmem:[#allocation2 + $0x18] sm:$0xff]
    %v64 = vld [vmem:[#allocation2 + $0x20] sm:$0xff]
    %v65 = vld [vmem:[#allocation2 + $0x28] sm:$0xff]
    %v66 = vld [vmem:[#allocation2 + $0x30] sm:$0xff]
    %v67 = vld [vmem:[#allocation2 + $0x38] sm:$0xff]
    %v68 = vld [vmem:[#allocation2 + $0x40] sm:$0xff]
    %v69 = vld [vmem:[#allocation2 + $0x48] sm:$0xff]
    %v70 = vld [vmem:[#allocation2 + $0x50] sm:$0xff]
    %v71 = vld [vmem:[#allocation2 + $0x58] sm:$0xff]
    %v72 = vld [vmem:[#allocation2 + $0x60] sm:$0xff]
    %v73 = vld [vmem:[#allocation2 + $0x68] sm:$0xff]
    %v74 = vld [vmem:[#allocation2 + $0x70] sm:$0xff]
    %v75 = vld [vmem:[#allocation2 + $0x78] sm:$0xff]
    %v76 = vld [vmem:[#allocation3] sm:$0xff]
    %v77 = vld [vmem:[#allocation3 + $0x8] sm:$0xff]
    %v78 = vld [vmem:[#allocation3 + $0x10] sm:$0xff]
    %v79 = vld [vmem:[#allocation3 + $0x18] sm:$0xff]
    %v80 = vld [vmem:[#allocation6] sm:$0xff]
    %v81 = vld [vmem:[#allocation6 + $0x8] sm:$0xff]
    %v82 = vld [vmem:[#allocation6 + $0x10] sm:$0xff]
    %v83 = vld [vmem:[#allocation6 + $0x18] sm:$0xff]
    %v84 = vld [vmem:[#allocation6 + $0x20] sm:$0xff]
    %v85 = vld [vmem:[#allocation6 + $0x28] sm:$0xff]
    %v86 = vld [vmem:[#allocation6 + $0x30] sm:$0xff]
    %v87 = vld [vmem:[#allocation6 + $0x38] sm:$0xff]
    %v88 = vld [vmem:[#allocation6 + $0x40] sm:$0xff]
    %v89 = vld [vmem:[#allocation6 + $0x48] sm:$0xff]
    %v90 = vld [vmem:[#allocation6 + $0x50] sm:$0xff]
    %v91 = vld [vmem:[#allocation6 + $0x58] sm:$0xff]
    %v92 = vld [vmem:[#allocation6 + $0x60] sm:$0xff]
    %v93 = vld [vmem:[#allocation6 + $0x68] sm:$0xff]
    %v94 = vld [vmem:[#allocation6 + $0x70] sm:$0xff]
    %v95 = vld [vmem:[#allocation6 + $0x78] sm:$0xff]
    %v96 = vld [vmem:[#allocation6 + $0x80] sm:$0xff]
    %v97 = vld [vmem:[#allocation6 + $0x88] sm:$0xff]
    %v98 = vld [vmem:[#allocation6 + $0x90] sm:$0xff]
    %v99 = vld [vmem:[#allocation6 + $0x98] sm:$0xff]
    %v100 = vld [vmem:[#allocation6 + $0xa0] sm:$0xff]
    %v101 = vld [vmem:[#allocation6 + $0xa8] sm:$0xff]
    %v102 = vld [vmem:[#allocation6 + $0xb0] sm:$0xff]
    %v103 = vld [vmem:[#allocation6 + $0xb8] sm:$0xff]
    %v104 = vld [vmem:[#allocation6 + $0xc0] sm:$0xff]
    %v105 = vld [vmem:[#allocation6 + $0xc8] sm:$0xff]
    %v106 = vld [vmem:[#allocation6 + $0xd0] sm:$0xff]
    %v107 = vld [vmem:[#allocation6 + $0xd8] sm:$0xff]
    %v108 = vld [vmem:[#allocation6 + $0xe0] sm:$0xff]
    %v109 = vld [vmem:[#allocation6 + $0xe8] sm:$0xff]
    %v110 = vld [vmem:[#allocation6 + $0xf0] sm:$0xff]
    %v111 = vld [vmem:[#allocation6 + $0xf8] sm:$0xff]
    %v112 = vld [vmem:[#allocation6 + $0x100] sm:$0xff]
    %v113 = vld [vmem:[#allocation6 + $0x108] sm:$0xff]
    %v114 = vld [vmem:[#allocation6 + $0x110] sm:$0xff]
    %v115 = vld [vmem:[#allocation6 + $0x118] sm:$0xff]
    %v116 = vld [vmem:[#allocation6 + $0x120] sm:$0xff]
    %v117 = vld [vmem:[#allocation6 + $0x128] sm:$0xff]
    %v118 = vld [vmem:[#allocation6 + $0x130] sm:$0xff]
    %v119 = vld [vmem:[#allocation6 + $0x138] sm:$0xff]
    %v120 = vld [vmem:[#allocation6 + $0x140] sm:$0xff]
    %v121 = vld [vmem:[#allocation6 + $0x148] sm:$0xff]
    %v122 = vld [vmem:[#allocation6 + $0x150] sm:$0xff]
    %v123 = vld [vmem:[#allocation6 + $0x158] sm:$0xff]
    %v124 = vld [vmem:[#allocation6 + $0x160] sm:$0xff]
    %v125 = vld [vmem:[#allocation6 + $0x168] sm:$0xff]
    %v126 = vld [vmem:[#allocation6 + $0x170] sm:$0xff]
    %v127 = vld [vmem:[#allocation6 + $0x178] sm:$0xff]
    %v128 = vld [vmem:[#allocation6 + $0x180] sm:$0xff]
    %v129 = vld [vmem:[#allocation6 + $0x188] sm:$0xff]
    %v130 = vld [vmem:[#allocation6 + $0x190] sm:$0xff]
    %v131 = vld [vmem:[#allocation6 + $0x198] sm:$0xff]
    %v132 = vld [vmem:[#allocation6 + $0x1a0] sm:$0xff]
    %v133 = vld [vmem:[#allocation6 + $0x1a8] sm:$0xff]
    %v134 = vld [vmem:[#allocation6 + $0x1b0] sm:$0xff]
    %v135 = vld [vmem:[#allocation6 + $0x1b8] sm:$0xff]
    %v136 = vld [vmem:[#allocation6 + $0x1c0] sm:$0xff]
    %v137 = vld [vmem:[#allocation6 + $0x1c8] sm:$0xff]
    %v138 = vld [vmem:[#allocation6 + $0x1d0] sm:$0xff]
    %v139 = vld [vmem:[#allocation6 + $0x1d8] sm:$0xff]
    %v140 = vld [vmem:[#allocation6 + $0x1e0] sm:$0xff]
    %v141 = vld [vmem:[#allocation6 + $0x1e8] sm:$0xff]
    %v142 = vld [vmem:[#allocation6 + $0x1f0] sm:$0xff]
    %v143 = vld [vmem:[#allocation6 + $0x1f8] sm:$0xff]
    %v148 = vunpack.c.l.b16 %v76
    %v149 = vunpack.c.h.b16 %v76
    %v150 = vunpack.c.l.b16 %v77
    %v151 = vunpack.c.h.b16 %v77
    %v152 = vunpack.c.l.b16 %v78
    %v153 = vunpack.c.h.b16 %v78
    %v154 = vunpack.c.l.b16 %v79
    %v155 = vunpack.c.h.b16 %v79
    %v156 = vpack.c.b16 %v150, %v148
    %v157 = vpack.c.b16 %v151, %v149
    %v158 = vpack.c.b16 %v154, %v152
    %v159 = vpack.c.b16 %v155, %v153
    %v228 = vunpack.c.l.b16 %v80
    %v229 = vunpack.c.h.b16 %v80
    %v230 = vunpack.c.l.b16 %v81
    %v231 = vunpack.c.h.b16 %v81
    %v232 = vunpack.c.l.b16 %v82
    %v233 = vunpack.c.h.b16 %v82
    %v234 = vunpack.c.l.b16 %v83
    %v235 = vunpack.c.h.b16 %v83
    %v236 = vunpack.c.l.b16 %v84
    %v237 = vunpack.c.h.b16 %v84
    %v238 = vunpack.c.l.b16 %v85
    %v239 = vunpack.c.h.b16 %v85
    %v240 = vunpack.c.l.b16 %v86
    %v241 = vunpack.c.h.b16 %v86
    %v242 = vunpack.c.l.b16 %v87
    %v243 = vunpack.c.h.b16 %v87
    %v244 = vunpack.c.l.b16 %v88
    %v245 = vunpack.c.h.b16 %v88
    %v246 = vunpack.c.l.b16 %v89
    %v247 = vunpack.c.h.b16 %v89
    %v248 = vunpack.c.l.b16 %v90
    %v249 = vunpack.c.h.b16 %v90
    %v250 = vunpack.c.l.b16 %v91
    %v251 = vunpack.c.h.b16 %v91
    %v252 = vunpack.c.l.b16 %v92
    %v253 = vunpack.c.h.b16 %v92
    %v254 = vunpack.c.l.b16 %v93
    %v255 = vunpack.c.h.b16 %v93
    %v256 = vunpack.c.l.b16 %v94
    %v257 = vunpack.c.h.b16 %v94
    %v258 = vunpack.c.l.b16 %v95
    %v259 = vunpack.c.h.b16 %v95
    %v260 = vunpack.c.l.b16 %v96
    %v261 = vunpack.c.h.b16 %v96
    %v262 = vunpack.c.l.b16 %v97
    %v263 = vunpack.c.h.b16 %v97
    %v264 = vunpack.c.l.b16 %v98
    %v265 = vunpack.c.h.b16 %v98
    %v266 = vunpack.c.l.b16 %v99
    %v267 = vunpack.c.h.b16 %v99
    %v268 = vunpack.c.l.b16 %v100
    %v269 = vunpack.c.h.b16 %v100
    %v270 = vunpack.c.l.b16 %v101
    %v271 = vunpack.c.h.b16 %v101
    %v272 = vunpack.c.l.b16 %v102
    %v273 = vunpack.c.h.b16 %v102
    %v274 = vunpack.c.l.b16 %v103
    %v275 = vunpack.c.h.b16 %v103
    %v276 = vunpack.c.l.b16 %v104
    %v277 = vunpack.c.h.b16 %v104
    %v278 = vunpack.c.l.b16 %v105
    %v279 = vunpack.c.h.b16 %v105
    %v280 = vunpack.c.l.b16 %v106
    %v281 = vunpack.c.h.b16 %v106
    %v282 = vunpack.c.l.b16 %v107
    %v283 = vunpack.c.h.b16 %v107
    %v284 = vunpack.c.l.b16 %v108
    %v285 = vunpack.c.h.b16 %v108
    %v286 = vunpack.c.l.b16 %v109
    %v287 = vunpack.c.h.b16 %v109
    %v288 = vunpack.c.l.b16 %v110
    %v289 = vunpack.c.h.b16 %v110
    %v290 = vunpack.c.l.b16 %v111
    %v291 = vunpack.c.h.b16 %v111
    %v292 = vunpack.c.l.b16 %v112
    %v293 = vunpack.c.h.b16 %v112
    %v294 = vunpack.c.l.b16 %v113
    %v295 = vunpack.c.h.b16 %v113
    %v296 = vunpack.c.l.b16 %v114
    %v297 = vunpack.c.h.b16 %v114
    %v298 = vunpack.c.l.b16 %v115
    %v299 = vunpack.c.h.b16 %v115
    %v300 = vunpack.c.l.b16 %v116
    %v301 = vunpack.c.h.b16 %v116
    %v302 = vunpack.c.l.b16 %v117
    %v303 = vunpack.c.h.b16 %v117
    %v304 = vunpack.c.l.b16 %v118
    %v305 = vunpack.c.h.b16 %v118
    %v306 = vunpack.c.l.b16 %v119
    %v307 = vunpack.c.h.b16 %v119
    %v308 = vunpack.c.l.b16 %v120
    %v309 = vunpack.c.h.b16 %v120
    %v310 = vunpack.c.l.b16 %v121
    %v311 = vunpack.c.h.b16 %v121
    %v312 = vunpack.c.l.b16 %v122
    %v313 = vunpack.c.h.b16 %v122
    %v314 = vunpack.c.l.b16 %v123
    %v315 = vunpack.c.h.b16 %v123
    %v316 = vunpack.c.l.b16 %v124
    %v317 = vunpack.c.h.b16 %v124
    %v318 = vunpack.c.l.b16 %v125
    %v319 = vunpack.c.h.b16 %v125
    %v320 = vunpack.c.l.b16 %v126
    %v321 = vunpack.c.h.b16 %v126
    %v322 = vunpack.c.l.b16 %v127
    %v323 = vunpack.c.h.b16 %v127
    %v324 = vunpack.c.l.b16 %v128
    %v325 = vunpack.c.h.b16 %v128
    %v326 = vunpack.c.l.b16 %v129
    %v327 = vunpack.c.h.b16 %v129
    %v328 = vunpack.c.l.b16 %v130
    %v329 = vunpack.c.h.b16 %v130
    %v330 = vunpack.c.l.b16 %v131
    %v331 = vunpack.c.h.b16 %v131
    %v332 = vunpack.c.l.b16 %v132
    %v333 = vunpack.c.h.b16 %v132
    %v334 = vunpack.c.l.b16 %v133
    %v335 = vunpack.c.h.b16 %v133
    %v336 = vunpack.c.l.b16 %v134
    %v337 = vunpack.c.h.b16 %v134
    %v338 = vunpack.c.l.b16 %v135
    %v339 = vunpack.c.h.b16 %v135
    %v340 = vunpack.c.l.b16 %v136
    %v341 = vunpack.c.h.b16 %v136
    %v342 = vunpack.c.l.b16 %v137
    %v343 = vunpack.c.h.b16 %v137
    %v344 = vunpack.c.l.b16 %v138
    %v345 = vunpack.c.h.b16 %v138
    %v346 = vunpack.c.l.b16 %v139
    %v347 = vunpack.c.h.b16 %v139
    %v348 = vunpack.c.l.b16 %v140
    %v349 = vunpack.c.h.b16 %v140
    %v350 = vunpack.c.l.b16 %v141
    %v351 = vunpack.c.h.b16 %v141
    %v352 = vunpack.c.l.b16 %v142
    %v353 = vunpack.c.h.b16 %v142
    %v354 = vunpack.c.l.b16 %v143
    %v355 = vunpack.c.h.b16 %v143
    %v356 = vpack.c.b16 %v232, %v228
    %v357 = vpack.c.b16 %v233, %v229
    %v358 = vpack.c.b16 %v234, %v230
    %v359 = vpack.c.b16 %v235, %v231
    %v360 = vpack.c.b16 %v240, %v236
    %v361 = vpack.c.b16 %v241, %v237
    %v362 = vpack.c.b16 %v242, %v238
    %v363 = vpack.c.b16 %v243, %v239
    %v364 = vpack.c.b16 %v248, %v244
    %v365 = vpack.c.b16 %v249, %v245
    %v366 = vpack.c.b16 %v250, %v246
    %v367 = vpack.c.b16 %v251, %v247
    %v368 = vpack.c.b16 %v256, %v252
    %v369 = vpack.c.b16 %v257, %v253
    %v370 = vpack.c.b16 %v258, %v254
    %v371 = vpack.c.b16 %v259, %v255
    %v372 = vpack.c.b16 %v264, %v260
    %v373 = vpack.c.b16 %v265, %v261
    %v374 = vpack.c.b16 %v266, %v262
    %v375 = vpack.c.b16 %v267, %v263
    %v376 = vpack.c.b16 %v272, %v268
    %v377 = vpack.c.b16 %v273, %v269
    %v378 = vpack.c.b16 %v274, %v270
    %v379 = vpack.c.b16 %v275, %v271
    %v380 = vpack.c.b16 %v280, %v276
    %v381 = vpack.c.b16 %v281, %v277
    %v382 = vpack.c.b16 %v282, %v278
    %v383 = vpack.c.b16 %v283, %v279
    %v384 = vpack.c.b16 %v288, %v284
    %v385 = vpack.c.b16 %v289, %v285
    %v386 = vpack.c.b16 %v290, %v286
    %v387 = vpack.c.b16 %v291, %v287
    %v388 = vpack.c.b16 %v296, %v292
    %v389 = vpack.c.b16 %v297, %v293
    %v390 = vpack.c.b16 %v298, %v294
    %v391 = vpack.c.b16 %v299, %v295
    %v392 = vpack.c.b16 %v304, %v300
    %v393 = vpack.c.b16 %v305, %v301
    %v394 = vpack.c.b16 %v306, %v302
    %v395 = vpack.c.b16 %v307, %v303
    %v396 = vpack.c.b16 %v312, %v308
    %v397 = vpack.c.b16 %v313, %v309
    %v398 = vpack.c.b16 %v314, %v310
    %v399 = vpack.c.b16 %v315, %v311
    %v400 = vpack.c.b16 %v320, %v316
    %v401 = vpack.c.b16 %v321, %v317
    %v402 = vpack.c.b16 %v322, %v318
    %v403 = vpack.c.b16 %v323, %v319
    %v404 = vpack.c.b16 %v328, %v324
    %v405 = vpack.c.b16 %v329, %v325
    %v406 = vpack.c.b16 %v330, %v326
    %v407 = vpack.c.b16 %v331, %v327
    %v408 = vpack.c.b16 %v336, %v332
    %v409 = vpack.c.b16 %v337, %v333
    %v410 = vpack.c.b16 %v338, %v334
    %v411 = vpack.c.b16 %v339, %v335
    %v412 = vpack.c.b16 %v344, %v340
    %v413 = vpack.c.b16 %v345, %v341
    %v414 = vpack.c.b16 %v346, %v342
    %v415 = vpack.c.b16 %v347, %v343
    %v416 = vpack.c.b16 %v352, %v348
    %v417 = vpack.c.b16 %v353, %v349
    %v418 = vpack.c.b16 %v354, %v350
    %v419 = vpack.c.b16 %v355, %v351
    %484 = vmatprep.subr.bf16.mxu0 %v357
    %485 = vmatpush1.bf16.msra.mxu0 %v356
    %486 = vmatprep.subr.bf16.mxu0 %v361
    %487 = vmatpush1.bf16.msra.mxu0 %v360
    %488 = vmatprep.subr.bf16.mxu0 %v365
    %489 = vmatpush1.bf16.msra.mxu0 %v364
    %490 = vmatprep.subr.bf16.mxu0 %v369
    %491 = vmatpush1.bf16.msra.mxu0 %v368
    %492 = vmatprep.subr.bf16.mxu0 %v373
    %493 = vmatpush1.bf16.msra.mxu0 %v372
    %494 = vmatprep.subr.bf16.mxu0 %v377
    %495 = vmatpush1.bf16.msra.mxu0 %v376
    %496 = vmatprep.subr.bf16.mxu0 %v381
    %497 = vmatpush1.bf16.msra.mxu0 %v380
    %498 = vmatprep.subr.bf16.mxu0 %v385
    %499 = vmatpush1.bf16.msra.mxu0 %v384
    %500 = vmatprep.subr.bf16.mxu0 %v389
    %501 = vmatpush1.bf16.msra.mxu0 %v388
    %502 = vmatprep.subr.bf16.mxu0 %v393
    %503 = vmatpush1.bf16.msra.mxu0 %v392
    %504 = vmatprep.subr.bf16.mxu0 %v397
    %505 = vmatpush1.bf16.msra.mxu0 %v396
    %506 = vmatprep.subr.bf16.mxu0 %v401
    %507 = vmatpush1.bf16.msra.mxu0 %v400
    %508 = vmatprep.subr.bf16.mxu0 %v405
    %509 = vmatpush1.bf16.msra.mxu0 %v404
    %510 = vmatprep.subr.bf16.mxu0 %v409
    %511 = vmatpush1.bf16.msra.mxu0 %v408
    %512 = vmatprep.subr.bf16.mxu0 %v413
    %513 = vmatpush1.bf16.msra.mxu0 %v412
    %514 = vmatprep.subr.bf16.mxu0 %v417
    %515 = vmatpush1.bf16.msra.mxu0 %v416
    %516 = vmatprep.mubr.bf16.mxu0 %v157
    %517 = vmatmul.mubr.bf16.gmra.mrb[0].mxu0 %v156
    %v518 = vpop.f32.mrb[0].mxu0
    %v519 = vadd.f32 0.0, %v518
    %v520 = vpop.f32.mrb[0].mxu0
    %v521 = vadd.f32 0.0, %v520
    %v522 = vpop.f32.mrb[0].mxu0
    %v523 = vadd.f32 0.0, %v522
    %v524 = vpop.f32.mrb[0].mxu0
    %v525 = vadd.f32 0.0, %v524
    %526 = vmatprep.mubr.bf16.mxu0 %v159
    %527 = vmatmul.mubr.bf16.gmra.mrb[0].mxu0 %v158
    %v528 = vpop.f32.mrb[0].mxu0
    %v529 = vadd.f32 0.0, %v528
    %v530 = vpop.f32.mrb[0].mxu0
    %v531 = vadd.f32 0.0, %v530
    %v532 = vpop.f32.mrb[0].mxu0
    %v533 = vadd.f32 0.0, %v532
    %v534 = vpop.f32.mrb[0].mxu0
    %v535 = vadd.f32 0.0, %v534
    %536 = vdwg.mxu0
    %537 = vmatprep.subr.bf16.mxu0 %v359
    %538 = vmatpush1.bf16.msra.mxu0 %v358
    %539 = vmatprep.subr.bf16.mxu0 %v363
    %540 = vmatpush1.bf16.msra.mxu0 %v362
    %541 = vmatprep.subr.bf16.mxu0 %v367
    %542 = vmatpush1.bf16.msra.mxu0 %v366
    %543 = vmatprep.subr.bf16.mxu0 %v371
    %544 = vmatpush1.bf16.msra.mxu0 %v370
    %545 = vmatprep.subr.bf16.mxu0 %v375
    %546 = vmatpush1.bf16.msra.mxu0 %v374
    %547 = vmatprep.subr.bf16.mxu0 %v379
    %548 = vmatpush1.bf16.msra.mxu0 %v378
    %549 = vmatprep.subr.bf16.mxu0 %v383
    %550 = vmatpush1.bf16.msra.mxu0 %v382
    %551 = vmatprep.subr.bf16.mxu0 %v387
    %552 = vmatpush1.bf16.msra.mxu0 %v386
    %553 = vmatprep.subr.bf16.mxu0 %v391
    %554 = vmatpush1.bf16.msra.mxu0 %v390
    %555 = vmatprep.subr.bf16.mxu0 %v395
    %556 = vmatpush1.bf16.msra.mxu0 %v394
    %557 = vmatprep.subr.bf16.mxu0 %v399
    %558 = vmatpush1.bf16.msra.mxu0 %v398
    %559 = vmatprep.subr.bf16.mxu0 %v403
    %560 = vmatpush1.bf16.msra.mxu0 %v402
    %561 = vmatprep.subr.bf16.mxu0 %v407
    %562 = vmatpush1.bf16.msra.mxu0 %v406
    %563 = vmatprep.subr.bf16.mxu0 %v411
    %564 = vmatpush1.bf16.msra.mxu0 %v410
    %565 = vmatprep.subr.bf16.mxu0 %v415
    %566 = vmatpush1.bf16.msra.mxu0 %v414
    %567 = vmatprep.subr.bf16.mxu0 %v419
    %568 = vmatpush1.bf16.msra.mxu0 %v418
    %569 = vmatprep.mubr.bf16.mxu0 %v157
    %570 = vmatmul.mubr.bf16.gmra.mrb[0].mxu0 %v156
    %v571 = vpop.f32.mrb[0].mxu0
    %v572 = vadd.f32 0.0, %v571
    %v573 = vpop.f32.mrb[0].mxu0
    %v574 = vadd.f32 0.0, %v573
    %v575 = vpop.f32.mrb[0].mxu0
    %v576 = vadd.f32 0.0, %v575
    %v577 = vpop.f32.mrb[0].mxu0
    %v578 = vadd.f32 0.0, %v577
    %579 = vmatprep.mubr.bf16.mxu0 %v159
    %580 = vmatmul.mubr.bf16.gmra.mrb[0].mxu0 %v158
    %v581 = vpop.f32.mrb[0].mxu0
    %v582 = vadd.f32 0.0, %v581
    %v583 = vpop.f32.mrb[0].mxu0
    %v584 = vadd.f32 0.0, %v583
    %v585 = vpop.f32.mrb[0].mxu0
    %v586 = vadd.f32 0.0, %v585
    %v587 = vpop.f32.mrb[0].mxu0
    %v588 = vadd.f32 0.0, %v587
    %589 = vdwg.mxu0
    %v590 = vadd.f32 %v60, %v519
    %v591 = vadd.f32 %v61, %v521
    %v592 = vadd.f32 %v62, %v572
    %v593 = vadd.f32 %v63, %v574
    %v594 = vadd.f32 %v64, %v523
    %v595 = vadd.f32 %v65, %v525
    %v596 = vadd.f32 %v66, %v576
    %v597 = vadd.f32 %v67, %v578
    %v598 = vadd.f32 %v68, %v529
    %v599 = vadd.f32 %v69, %v531
    %v600 = vadd.f32 %v70, %v582
    %v601 = vadd.f32 %v71, %v584
    %v602 = vadd.f32 %v72, %v533
    %v603 = vadd.f32 %v73, %v535
    %v604 = vadd.f32 %v74, %v586
    %v605 = vadd.f32 %v75, %v588
    %606 = vst [vmem:[#allocation2] sm:$0xff] %v590
    %607 = vst [vmem:[#allocation2 + $0x8] sm:$0xff] %v591
    %608 = vst [vmem:[#allocation2 + $0x10] sm:$0xff] %v592
    %609 = vst [vmem:[#allocation2 + $0x18] sm:$0xff] %v593
    %610 = vst [vmem:[#allocation2 + $0x20] sm:$0xff] %v594
    %611 = vst [vmem:[#allocation2 + $0x28] sm:$0xff] %v595
    %612 = vst [vmem:[#allocation2 + $0x30] sm:$0xff] %v596
    %613 = vst [vmem:[#allocation2 + $0x38] sm:$0xff] %v597
    %614 = vst [vmem:[#allocation2 + $0x40] sm:$0xff] %v598
    %615 = vst [vmem:[#allocation2 + $0x48] sm:$0xff] %v599
    %616 = vst [vmem:[#allocation2 + $0x50] sm:$0xff] %v600
    %617 = vst [vmem:[#allocation2 + $0x58] sm:$0xff] %v601
    %618 = vst [vmem:[#allocation2 + $0x60] sm:$0xff] %v602
    %619 = vst [vmem:[#allocation2 + $0x68] sm:$0xff] %v603
    %620 = vst [vmem:[#allocation2 + $0x70] sm:$0xff] %v604
    %621 = vst [vmem:[#allocation2 + $0x78] sm:$0xff] %v605
    // Predicated region
    $region22: #{tpu_custom_call.1} parent=1 // pred_check
      %p622 = pneg %p40
    $region23: #{tpu_custom_call.1} parent=1 // pred_check_branch
      %624 = sbr.rel (%p622) target = $region25
    $region24: #{tpu_custom_call.1} parent=1 // pred_region
      %v625 = vld [vmem:[#allocation2] sm:$0xff]
      %v626 = vld [vmem:[#allocation2 + $0x8] sm:$0xff]
      %v627 = vld [vmem:[#allocation2 + $0x10] sm:$0xff]
      %v628 = vld [vmem:[#allocation2 + $0x18] sm:$0xff]
      %v629 = vld [vmem:[#allocation2 + $0x20] sm:$0xff]
      %v630 = vld [vmem:[#allocation2 + $0x28] sm:$0xff]
      %v631 = vld [vmem:[#allocation2 + $0x30] sm:$0xff]
      %v632 = vld [vmem:[#allocation2 + $0x38] sm:$0xff]
      %v633 = vld [vmem:[#allocation2 + $0x40] sm:$0xff]
      %v634 = vld [vmem:[#allocation2 + $0x48] sm:$0xff]
      %v635 = vld [vmem:[#allocation2 + $0x50] sm:$0xff]
      %v636 = vld [vmem:[#allocation2 + $0x58] sm:$0xff]
      %v637 = vld [vmem:[#allocation2 + $0x60] sm:$0xff]
      %v638 = vld [vmem:[#allocation2 + $0x68] sm:$0xff]
      %v639 = vld [vmem:[#allocation2 + $0x70] sm:$0xff]
      %v640 = vld [vmem:[#allocation2 + $0x78] sm:$0xff]
      %641 = vst [vmem:[#allocation8] sm:$0xff] %v625
      %642 = vst [vmem:[#allocation8 + $0x8] sm:$0xff] %v626
      %643 = vst [vmem:[#allocation8 + $0x10] sm:$0xff] %v627
      %644 = vst [vmem:[#allocation8 + $0x18] sm:$0xff] %v628
      %645 = vst [vmem:[#allocation8 + $0x20] sm:$0xff] %v629
      %646 = vst [vmem:[#allocation8 + $0x28] sm:$0xff] %v630
      %647 = vst [vmem:[#allocation8 + $0x30] sm:$0xff] %v631
      %648 = vst [vmem:[#allocation8 + $0x38] sm:$0xff] %v632
      %649 = vst [vmem:[#allocation8 + $0x40] sm:$0xff] %v633
      %650 = vst [vmem:[#allocation8 + $0x48] sm:$0xff] %v634
      %651 = vst [vmem:[#allocation8 + $0x50] sm:$0xff] %v635
      %652 = vst [vmem:[#allocation8 + $0x58] sm:$0xff] %v636
      %653 = vst [vmem:[#allocation8 + $0x60] sm:$0xff] %v637
      %654 = vst [vmem:[#allocation8 + $0x68] sm:$0xff] %v638
      %655 = vst [vmem:[#allocation8 + $0x70] sm:$0xff] %v639
      %656 = vst [vmem:[#allocation8 + $0x78] sm:$0xff] %v640
    $region25: #{tpu_custom_call.1} parent=1 // pred_fallthru
      _
    // Predicated region
    $region26: #{tpu_custom_call.1} parent=1 // pred_check
      _
    $region27: #{tpu_custom_call.1} parent=1 // pred_check_branch
      %658 = sbr.rel (0) target = $region29
    $region28: #{tpu_custom_call.1} parent=1 // pred_region
      %s660 = ssub.s32 2048, 2048
      %661 = vsyncadd [#allocation5], %s660
      %s662 = sshll.u32 [#allocation8], 4
      %s663 = int_to_ptr.vmem [resolvable:$true] %s662
      %668 = dma.vmem_to_hbm [thread:$0]  %s663, 2048, %s2, [#allocation5], 512, 512, 32
    $region29: #{tpu_custom_call.1} parent=1 // pred_fallthru
      _
    // Predicated region
    $region30: #{tpu_custom_call.1} parent=1 // pred_check
      _
    $region31: #{tpu_custom_call.1} parent=1 // pred_check_branch
      %670 = sbr.rel (0) target = $region33
    $region32: #{tpu_custom_call.1} parent=1 // pred_region
      %671 = dma.done [#allocation5], 2048
    $region33: #{tpu_custom_call.1} parent=1 // pred_fallthru
      _
    %672 = vsyncpa [#allocation4], 1
    %673 = vsyncpa [#allocation7], 1
    %674 = vsyncpa [#allocation5], 1

</llo_original>
